<compile_context>
chip_gen: v7x
topology: tpu7x:2x2x1
jax: 0.10.0
libtpu: 0.0.40
codegen_flags: <defaults>
</compile_context>

<pallas_src>
import functools

import jax
import jax.numpy as jnp
from jax.experimental import pallas as pl
from jax.experimental.pallas import tpu as pltpu


def _round_up(x, m):
    return m * pl.cdiv(x, m)


# ----------------------------------------------------------------------------
# Kernel: one m-tile, all heads.
#   for h: hid = relu(x @ w1[h] + b1[h]);  acc += hid @ w2_packed[h]
#   out = acc + b2_packed        (each head's w2 is zero outside its lane range)
# ----------------------------------------------------------------------------
def _multitask_kernel(x_ref, w1_ref, b1_ref, w2_ref, b2_ref, o_ref, *,
                      num_heads):
    x = x_ref[...]                                          # (tm, 2D) compute dt
    acc = jnp.zeros((x_ref.shape[0], o_ref.shape[-1]), jnp.float32)
    for h in range(num_heads):                              # static unroll, H small
        hid = jnp.dot(x, w1_ref[h], preferred_element_type=jnp.float32)
        hid = jnp.maximum(hid + b1_ref[h], 0.0)             # f32 bias+ReLU epilogue
        acc = acc + jnp.dot(hid.astype(w2_ref.dtype), w2_ref[h],
                            preferred_element_type=jnp.float32)
    o_ref[...] = (acc + b2_ref[...]).astype(o_ref.dtype)    # lane-dense store


def multitask_fused_pallas(xf, w1, b1, w2p, b2p, *, tm=None,
                           vmem_budget=48 * 1024 * 1024):
    """xf: (M, 2D); w1: (H, 2D, D2); b1: (H, 1, D2) f32;
    w2p: (H, D2, Lp) lane-packed; b2p: (1, Lp) f32.  Returns (M, Lp) f32."""
    M, K = xf.shape
    H, _, D2 = w1.shape
    Lp = w2p.shape[2]
    in_bytes = jnp.dtype(xf.dtype).itemsize
    w_bytes = (w1.size * jnp.dtype(w1.dtype).itemsize
               + w2p.size * jnp.dtype(w2p.dtype).itemsize
               + b1.size * 4 + b2p.size * 4)

    if tm is None:
        if M <= 8:
            tm = M                                # full (allowed: equals array dim)
        else:
            tm = min(1024, _round_up(M, 8))
            if pl.cdiv(M, tm) < 2:                # >=2 parallel steps (v7x: 2 TCs)
                tm = max(8, _round_up(pl.cdiv(M, 2), 8))
            # Shrink until double-buffered act/out blocks + resident weights fit.
            while tm > 8 and (2 * (tm * K * in_bytes + tm * Lp * 4) + w_bytes
                              > vmem_budget):
                tm = max(8, _round_up(tm // 2, 8))
    grid = (pl.cdiv(M, tm),)

    vmem_need = 2 * (tm * K * in_bytes + tm * Lp * 4) + w_bytes + (2 << 20)
    vmem_limit = int(min(max(vmem_need, 4 << 20), vmem_budget))

    flops = 2 * M * H * (K * D2 + D2 * Lp)
    bytes_accessed = M * K * in_bytes + w_bytes + M * Lp * 4

    kernel = functools.partial(_multitask_kernel, num_heads=H)
    return pl.pallas_call(
        kernel,
        out_shape=jax.ShapeDtypeStruct((M, Lp), jnp.float32),
        grid=grid,
        in_specs=[
            pl.BlockSpec((tm, K), lambda m: (m, 0)),          # activations stream
            pl.BlockSpec((H, K, D2), lambda m: (0, 0, 0)),    # weights resident
            pl.BlockSpec((H, 1, D2), lambda m: (0, 0, 0)),    # (constant index_map
            pl.BlockSpec((H, D2, Lp), lambda m: (0, 0, 0)),   #  -> single DMA)
            pl.BlockSpec((1, Lp), lambda m: (0, 0)),
        ],
        out_specs=pl.BlockSpec((tm, Lp), lambda m: (m, 0)),
        compiler_params=pltpu.CompilerParams(
            dimension_semantics=("parallel",),
            vmem_limit_bytes=vmem_limit,
        ),
        cost_estimate=pl.CostEstimate(flops=flops, transcendentals=0,
                                      bytes_accessed=bytes_accessed),
    )(xf, w1, b1, w2p, b2p)


# ----------------------------------------------------------------------------
# One-time weight preparation (hoisted out of the forward path).
# ----------------------------------------------------------------------------
def prepare_multitask_params(all_params, prefix_list_target, *,
                             compute_dtype=jnp.bfloat16):
    """Stack w1/b1, lane-pack w2/b2 into one output slab, pre-cast MXU operands.
    Call once; reuse the result across forward calls."""
    label_nums = [all_params[p]["w2"].shape[1] for p in prefix_list_target]
    offsets = [0]
    for L in label_nums:
        offsets.append(offsets[-1] + L)
    Lp = _round_up(offsets[-1], 128)              # single lane-dense output slab

    w1 = jnp.stack([all_params[p]["w1"] for p in prefix_list_target]
                   ).astype(compute_dtype)        # (H, 2D, D2)
    b1 = jnp.stack([all_params[p]["b1"] for p in prefix_list_target]
                   ).astype(jnp.float32)          # (H, 1, D2) f32 epilogue
    D2 = w1.shape[2]
    H = len(prefix_list_target)
    w2p = jnp.zeros((H, D2, Lp), jnp.float32)
    b2p = jnp.zeros((1, Lp), jnp.float32)
    for h, (p, L) in enumerate(zip(prefix_list_target, label_nums)):
        off = offsets[h]
        w2p = w2p.at[h, :, off:off + L].set(all_params[p]["w2"])
        b2p = b2p.at[0, off:off + L].set(all_params[p]["b2"][0])
    w2p = w2p.astype(compute_dtype)

    head_slices = {p: (offsets[h], label_nums[h])
                   for h, p in enumerate(prefix_list_target)}
    packed = dict(w1=w1, b1=b1, w2p=w2p, b2p=b2p, compute_dtype=compute_dtype)
    return packed, head_slices


def multitask_forward(packed, head_slices, z, elm_agg_emb):
    S, N, D = z.shape
    M = N * S
    cdtype = packed["compute_dtype"]
    # permute(1,0,2) + concat, fused by XLA; pre-cast so the kernel's HBM reads
    # are already narrow (bf16 halves activation DMA bytes).
    xf = jnp.concatenate(
        [jnp.transpose(z, (1, 0, 2)), jnp.transpose(elm_agg_emb, (1, 0, 2))],
        axis=-1).reshape(M, 2 * D).astype(cdtype)

    out = multitask_fused_pallas(xf, packed["w1"], packed["b1"],
                                 packed["w2p"], packed["b2p"])   # (M, Lp) f32

    outputs = {}
    for prefix, (off, L) in head_slices.items():
        outputs[prefix] = out[:, off:off + L].reshape(N, S, L)
    return outputs


# ----------------------------------------------------------------------------
# Reference + test harness.
# ----------------------------------------------------------------------------
def make_fcn_params(key, d_in, label_num, dtype=jnp.float32):
    k1, k2, k3, k4 = jax.random.split(key, 4)
    scale1 = 1.0 / jnp.sqrt(d_in)
    return {
        "w1": jax.random.uniform(k1, (d_in, d_in), dtype, -scale1, scale1),
        "b1": jax.random.uniform(k2, (1, d_in), dtype, -scale1, scale1),
        "w2": jax.random.uniform(k3, (d_in, label_num), dtype, -scale1, scale1),
        "b2": jax.random.uniform(k4, (1, label_num), dtype, -scale1, scale1),
    }


def _reference_fcn(params, z, elm_agg_emb):
    inp = jnp.concatenate([z, elm_agg_emb], axis=2)
    x = jnp.transpose(inp, (1, 0, 2))
    h = jnp.maximum(x @ params["w1"] + params["b1"][0], 0.0)
    return h @ params["w2"] + params["b2"][0]


if __name__ == "__main__":
    # Small shapes consistent with the module: seq-first (S, N, D).
    S, N, D = 8, 2, 32
    d_in = D * 2                      # bypass=True -> Linearx2(2*d_model, L)

    prediction_out_dims = {
        "text_font": 16,
        "text_font_size": 8,
        "text_align_type": 4,
    }
    prefix_list_target = list(prediction_out_dims.keys())

    key = jax.random.PRNGKey(0)
    key, kz, ke = jax.random.split(key, 3)
    z = jax.random.normal(kz, (S, N, D), jnp.float32)
    elm_agg_emb = jax.random.normal(ke, (S, N, D), jnp.float32)

    all_params = {}
    for i, prefix in enumerate(prefix_list_target):
        pkey = jax.random.fold_in(jax.random.PRNGKey(42), i)
        all_params[prefix] = make_fcn_params(pkey, d_in,
                                             prediction_out_dims[prefix])

    # f32 operands: exact-semantics check against the pure-JAX reference.
    packed_f32, slices = prepare_multitask_params(
        all_params, prefix_list_target, compute_dtype=jnp.float32)
    outs_f32 = multitask_forward(packed_f32, slices, z, elm_agg_emb)
    outs_f32 = jax.tree_util.tree_map(jax.block_until_ready, outs_f32)
    for prefix in prefix_list_target:
        ref = _reference_fcn(all_params[prefix], z, elm_agg_emb)
        assert outs_f32[prefix].shape == (N, S, prediction_out_dims[prefix])
        assert jnp.allclose(outs_f32[prefix], ref, atol=1e-4, rtol=1e-4), prefix

    # bf16 MXU operands pre-cast in the wrapper (f32 accumulate + epilogue):
    # the recommended production path on v5e / v6e / v7x.
    packed_bf16, slices = prepare_multitask_params(
        all_params, prefix_list_target, compute_dtype=jnp.bfloat16)
    outs_bf16 = multitask_forward(packed_bf16, slices, z, elm_agg_emb)
    outs_bf16 = jax.tree_util.tree_map(jax.block_until_ready, outs_bf16)
    for prefix in prefix_list_target:
        ref = _reference_fcn(all_params[prefix], z, elm_agg_emb)
        assert jnp.allclose(outs_bf16[prefix], ref, atol=5e-2, rtol=5e-2), prefix

    print("KERNEL_OK")
</pallas_src>

<mosaic_0001>
module attributes {stable_mosaic.version = 11 : i64} {
  func.func @_multitask_kernel(%arg0: i32, %arg1: memref<8x64xf32, #tpu.memory_space<vmem>>, %arg2: memref<3x64x64xf32, #tpu.memory_space<vmem>>, %arg3: memref<3x1x64xf32, #tpu.memory_space<vmem>>, %arg4: memref<3x64x128xf32, #tpu.memory_space<vmem>>, %arg5: memref<1x128xf32, #tpu.memory_space<vmem>>, %arg6: memref<8x128xf32, #tpu.memory_space<vmem>>) attributes {dimension_semantics = [#tpu.dimension_semantics<parallel>], iteration_bounds = array<i64: 2>, scalar_prefetch = 0 : i64, scratch_operands = 0 : i64, tpu.core_type = #tpu.core_type<tc>, window_params = [{transform_indices = @transform_0, window_bounds = array<i64: 8, 64>}, {pipeline_mode = #tpu.pipeline_mode<synchronous>, transform_indices = @transform_1, window_bounds = array<i64: 3, 64, 64>}, {pipeline_mode = #tpu.pipeline_mode<synchronous>, transform_indices = @transform_2, window_bounds = array<i64: 3, 1, 64>}, {pipeline_mode = #tpu.pipeline_mode<synchronous>, transform_indices = @transform_3, window_bounds = array<i64: 3, 64, 128>}, {pipeline_mode = #tpu.pipeline_mode<synchronous>, transform_indices = @transform_4, window_bounds = array<i64: 1, 128>}, {transform_indices = @transform_5, window_bounds = array<i64: 8, 128>}]} {
    %c0 = arith.constant 0 : index
    %c0_0 = arith.constant 0 : index
    %0 = vector.load %arg1[%c0, %c0_0] : memref<8x64xf32, #tpu.memory_space<vmem>>, vector<8x64xf32>
    %cst = arith.constant 0.000000e+00 : f32
    %1 = vector.broadcast %cst : f32 to vector<8x128xf32>
    %c0_1 = arith.constant 0 : index
    %c0_2 = arith.constant 0 : index
    %c0_3 = arith.constant 0 : index
    %2 = vector.load %arg2[%c0_1, %c0_2, %c0_3] : memref<3x64x64xf32, #tpu.memory_space<vmem>>, vector<1x64x64xf32>
    %3 = vector.shape_cast %2 : vector<1x64x64xf32> to vector<64x64xf32>
    %cst_4 = arith.constant dense<0.000000e+00> : vector<8x64xf32>
    %4 = tpu.matmul %0, %3, %cst_4 {dimension_numbers = #tpu.dot_dimension_numbers<[1], [0], [0], [1], [0, 0, 1, 1], [], []>} : vector<8x64xf32>, vector<64x64xf32>, vector<8x64xf32> -> vector<8x64xf32>
    %c0_5 = arith.constant 0 : index
    %c0_6 = arith.constant 0 : index
    %c0_7 = arith.constant 0 : index
    %5 = vector.load %arg3[%c0_5, %c0_6, %c0_7] : memref<3x1x64xf32, #tpu.memory_space<vmem>>, vector<1x1x64xf32>
    %6 = vector.shape_cast %5 : vector<1x1x64xf32> to vector<1x64xf32>
    %7 = vector.broadcast %6 : vector<1x64xf32> to vector<8x64xf32>
    %8 = arith.addf %4, %7 : vector<8x64xf32>
    %cst_8 = arith.constant 0.000000e+00 : f32
    %9 = vector.broadcast %cst_8 : f32 to vector<8x64xf32>
    %10 = arith.maximumf %8, %9 : vector<8x64xf32>
    %c0_9 = arith.constant 0 : index
    %c0_10 = arith.constant 0 : index
    %c0_11 = arith.constant 0 : index
    %11 = vector.load %arg4[%c0_9, %c0_10, %c0_11] : memref<3x64x128xf32, #tpu.memory_space<vmem>>, vector<1x64x128xf32>
    %12 = vector.shape_cast %11 : vector<1x64x128xf32> to vector<64x128xf32>
    %cst_12 = arith.constant dense<0.000000e+00> : vector<8x128xf32>
    %13 = tpu.matmul %10, %12, %cst_12 {dimension_numbers = #tpu.dot_dimension_numbers<[1], [0], [0], [1], [0, 0, 1, 1], [], []>} : vector<8x64xf32>, vector<64x128xf32>, vector<8x128xf32> -> vector<8x128xf32>
    %14 = arith.addf %1, %13 : vector<8x128xf32>
    %c1 = arith.constant 1 : index
    %c0_13 = arith.constant 0 : index
    %c0_14 = arith.constant 0 : index
    %15 = vector.load %arg2[%c1, %c0_13, %c0_14] : memref<3x64x64xf32, #tpu.memory_space<vmem>>, vector<1x64x64xf32>
    %16 = vector.shape_cast %15 : vector<1x64x64xf32> to vector<64x64xf32>
    %cst_15 = arith.constant dense<0.000000e+00> : vector<8x64xf32>
    %17 = tpu.matmul %0, %16, %cst_15 {dimension_numbers = #tpu.dot_dimension_numbers<[1], [0], [0], [1], [0, 0, 1, 1], [], []>} : vector<8x64xf32>, vector<64x64xf32>, vector<8x64xf32> -> vector<8x64xf32>
    %c1_16 = arith.constant 1 : index
    %c0_17 = arith.constant 0 : index
    %c0_18 = arith.constant 0 : index
    %18 = vector.load %arg3[%c1_16, %c0_17, %c0_18] : memref<3x1x64xf32, #tpu.memory_space<vmem>>, vector<1x1x64xf32>
    %19 = vector.shape_cast %18 : vector<1x1x64xf32> to vector<1x64xf32>
    %20 = vector.broadcast %19 : vector<1x64xf32> to vector<8x64xf32>
    %21 = arith.addf %17, %20 : vector<8x64xf32>
    %cst_19 = arith.constant 0.000000e+00 : f32
    %22 = vector.broadcast %cst_19 : f32 to vector<8x64xf32>
    %23 = arith.maximumf %21, %22 : vector<8x64xf32>
    %c1_20 = arith.constant 1 : index
    %c0_21 = arith.constant 0 : index
    %c0_22 = arith.constant 0 : index
    %24 = vector.load %arg4[%c1_20, %c0_21, %c0_22] : memref<3x64x128xf32, #tpu.memory_space<vmem>>, vector<1x64x128xf32>
    %25 = vector.shape_cast %24 : vector<1x64x128xf32> to vector<64x128xf32>
    %cst_23 = arith.constant dense<0.000000e+00> : vector<8x128xf32>
    %26 = tpu.matmul %23, %25, %cst_23 {dimension_numbers = #tpu.dot_dimension_numbers<[1], [0], [0], [1], [0, 0, 1, 1], [], []>} : vector<8x64xf32>, vector<64x128xf32>, vector<8x128xf32> -> vector<8x128xf32>
    %27 = arith.addf %14, %26 : vector<8x128xf32>
    %c2 = arith.constant 2 : index
    %c0_24 = arith.constant 0 : index
    %c0_25 = arith.constant 0 : index
    %28 = vector.load %arg2[%c2, %c0_24, %c0_25] : memref<3x64x64xf32, #tpu.memory_space<vmem>>, vector<1x64x64xf32>
    %29 = vector.shape_cast %28 : vector<1x64x64xf32> to vector<64x64xf32>
    %cst_26 = arith.constant dense<0.000000e+00> : vector<8x64xf32>
    %30 = tpu.matmul %0, %29, %cst_26 {dimension_numbers = #tpu.dot_dimension_numbers<[1], [0], [0], [1], [0, 0, 1, 1], [], []>} : vector<8x64xf32>, vector<64x64xf32>, vector<8x64xf32> -> vector<8x64xf32>
    %c2_27 = arith.constant 2 : index
    %c0_28 = arith.constant 0 : index
    %c0_29 = arith.constant 0 : index
    %31 = vector.load %arg3[%c2_27, %c0_28, %c0_29] : memref<3x1x64xf32, #tpu.memory_space<vmem>>, vector<1x1x64xf32>
    %32 = vector.shape_cast %31 : vector<1x1x64xf32> to vector<1x64xf32>
    %33 = vector.broadcast %32 : vector<1x64xf32> to vector<8x64xf32>
    %34 = arith.addf %30, %33 : vector<8x64xf32>
    %cst_30 = arith.constant 0.000000e+00 : f32
    %35 = vector.broadcast %cst_30 : f32 to vector<8x64xf32>
    %36 = arith.maximumf %34, %35 : vector<8x64xf32>
    %c2_31 = arith.constant 2 : index
    %c0_32 = arith.constant 0 : index
    %c0_33 = arith.constant 0 : index
    %37 = vector.load %arg4[%c2_31, %c0_32, %c0_33] : memref<3x64x128xf32, #tpu.memory_space<vmem>>, vector<1x64x128xf32>
    %38 = vector.shape_cast %37 : vector<1x64x128xf32> to vector<64x128xf32>
    %cst_34 = arith.constant dense<0.000000e+00> : vector<8x128xf32>
    %39 = tpu.matmul %36, %38, %cst_34 {dimension_numbers = #tpu.dot_dimension_numbers<[1], [0], [0], [1], [0, 0, 1, 1], [], []>} : vector<8x64xf32>, vector<64x128xf32>, vector<8x128xf32> -> vector<8x128xf32>
    %40 = arith.addf %27, %39 : vector<8x128xf32>
    %c0_35 = arith.constant 0 : index
    %c0_36 = arith.constant 0 : index
    %41 = vector.load %arg5[%c0_35, %c0_36] : memref<1x128xf32, #tpu.memory_space<vmem>>, vector<1x128xf32>
    %42 = vector.broadcast %41 : vector<1x128xf32> to vector<8x128xf32>
    %43 = arith.addf %40, %42 : vector<8x128xf32>
    %c0_37 = arith.constant 0 : index
    %c0_38 = arith.constant 0 : index
    %44 = vector.load %arg6[%c0_37, %c0_38] : memref<8x128xf32, #tpu.memory_space<vmem>>, vector<8x128xf32>
    tpu.vector_store %arg6[%c0_37, %c0_38], %43 {strides = array<i32>} : memref<8x128xf32, #tpu.memory_space<vmem>>, vector<8x128xf32>,
    return
  }
  func.func @transform_0(%arg0: i32) -> (i32, i32) {
    %c0_i32 = arith.constant 0 : i32
    %c0_i32_0 = arith.constant 0 : i32
    return %arg0, %c0_i32 : i32, i32
  }
  func.func @transform_1(%arg0: i32) -> (i32, i32, i32) {
    %c0_i32 = arith.constant 0 : i32
    %c0_i32_0 = arith.constant 0 : i32
    %c0_i32_1 = arith.constant 0 : i32
    %c0_i32_2 = arith.constant 0 : i32
    return %c0_i32, %c0_i32_0, %c0_i32_1 : i32, i32, i32
  }
  func.func @transform_2(%arg0: i32) -> (i32, i32, i32) {
    %c0_i32 = arith.constant 0 : i32
    %c0_i32_0 = arith.constant 0 : i32
    %c0_i32_1 = arith.constant 0 : i32
    %c0_i32_2 = arith.constant 0 : i32
    return %c0_i32, %c0_i32_0, %c0_i32_1 : i32, i32, i32
  }
  func.func @transform_3(%arg0: i32) -> (i32, i32, i32) {
    %c0_i32 = arith.constant 0 : i32
    %c0_i32_0 = arith.constant 0 : i32
    %c0_i32_1 = arith.constant 0 : i32
    %c0_i32_2 = arith.constant 0 : i32
    return %c0_i32, %c0_i32_0, %c0_i32_1 : i32, i32, i32
  }
  func.func @transform_4(%arg0: i32) -> (i32, i32) {
    %c0_i32 = arith.constant 0 : i32
    %c0_i32_0 = arith.constant 0 : i32
    %c0_i32_1 = arith.constant 0 : i32
    return %c0_i32, %c0_i32_0 : i32, i32
  }
  func.func @transform_5(%arg0: i32) -> (i32, i32) {
    %c0_i32 = arith.constant 0 : i32
    %c0_i32_0 = arith.constant 0 : i32
    return %arg0, %c0_i32 : i32, i32
  }
}

</mosaic_0001>

<llo_original>
// kernel: tpu_custom_call.1
$region0: #{tpu_custom_call.1}
  #allocation0 [shape = 'u32[]', space=smem, size = 0x4, offset = 0x4, fixed_abs, tag = 'smem constant byte address 0x4 - core index']
  #allocation1 [shape = 'u32[144,128]{1,0:T(1,128)}', space=vmem, size = 0x12000, scoped, tag = 'internal scratch']
  %s0 = inlined_call_operand.hbm [shape: f32[16,64], index: 0, kind: input, shape index: {}]
  %s1 = inlined_call_operand.hbm [shape: f32[3,64,64], index: 1, kind: input, shape index: {}]
  %s2 = inlined_call_operand.vmem [shape: f32[3,1,64], index: 2, kind: input, shape index: {}]
  %s3 = inlined_call_operand.hbm [shape: f32[3,64,128], index: 3, kind: input, shape index: {}]
  %s4 = inlined_call_operand.vmem [shape: f32[1,128], index: 4, kind: input, shape index: {}]
  %s5 = inlined_call_operand.hbm [shape: f32[16,128], index: 5, kind: output, shape index: {}]
  %s6 = sld [smem:[#allocation0]]
  $region65: #{tpu_custom_call.1} parent=0
    _
  %s8 = ssub.s32 1, %s6
  %s9 = scalar_select 0, %s8, %s6
  $region1: #{tpu_custom_call.1} parent=0
    #allocation2 [shape = 'u8[8192]{0}', space=vmem, size = 0x2000, scoped, tag = 'input window, operand 0']
    #allocation3 [shape = 's32[2]{0}', space=sflag, size = 0x8, scoped, tag = 'scoped memory for tpu_custom_call.1']
    #allocation4 [shape = 's32[2]{0}', space=sflag, size = 0x8, scoped, tag = 'scoped memory for tpu_custom_call.1']
    #allocation5 [shape = 'u8[98304]{0}', space=vmem, size = 0x18000, scoped, tag = 'input window, operand 1, single buffered']
    #allocation6 [shape = 's32[1]{0}', space=sflag, size = 0x4, scoped, tag = 'scoped memory for tpu_custom_call.1']
    #allocation7 [shape = 'u8[98304]{0}', space=vmem, size = 0x18000, scoped, tag = 'input window, operand 3, single buffered']
    #allocation8 [shape = 'u8[8192]{0}', space=vmem, size = 0x2000, scoped, tag = 'output window, operand 0']
    %10 = vsyncpa [#allocation3], 0
    %s11 = scalar_lea.sflag [#allocation3], 1
    %12 = vsyncpa %s11, 0
    %13 = vsyncpa [#allocation6], 0
    %14 = vsyncpa [#allocation4], 0
    %s15 = scalar_lea.sflag [#allocation4], 1
    %16 = vsyncpa %s15, 0
    loop: start=0, step=1, limit=4
    $region2: #{tpu_custom_call.1} parent=1 // loop_pre_header
      _
    $region3: #{tpu_custom_call.1} parent=1 // loop_header
      %s18 = sphi 0, %s22
      %p19 = scmp.ge.s32.totalorder %s18, 4
      %s28 = sphi 0, %s30
      %s31 = sphi 0, %s28
      %s32 = sphi 0, %s31
      %s48 = sphi 0, %s32
      %s52 = sphi 0, %s52
      %s54 = sphi 0, %s52
      %s55 = sphi 0, %s54
      %s69 = sphi 0, %s55
      %s73 = sphi 0, %s73
      %s75 = sphi 0, %s73
      %s76 = sphi 0, %s75
      %s90 = sphi 0, %s76
      %s94 = sphi 0, %s94
      %s96 = sphi 0, %s94
      %s97 = sphi 0, %s96
      %s111 = sphi 0, %s97
      %s115 = sphi 0, %s115
      %s117 = sphi 0, %s115
      %s118 = sphi 0, %s117
      %s132 = sphi 0, %s118
      %s138 = sphi 0, %s140
      %s141 = sphi 0, %s138
      %s142 = sphi 0, %s141
      %s158 = sphi 0, %s142
    $region4: #{tpu_custom_call.1} parent=1 // loop_header_branch
      %21 = sbr.rel (%p19) target = $region8
    $region5: #{tpu_custom_call.1} parent=1 // loop_body
      %s23 = ssub.s32 %s18, 1
      %s24 = ssub.s32 %s18, 2
      %s25 = sadd.s32 %s18, 1
      %s26 = ssub.s32 %s18, %s25
      %p27 = scmp.eq.s32.totalorder %s26, 0
      %s29 = sadd.s32 %s28, 1
      %s30 = scalar_select %p27, %s28, %s29
      %p33 = pneg %p27
      %p34 = scmp.eq.s32.totalorder %s18, 1
      %p35 = por %p33, %p34
      %p36 = scmp.ne.s32.totalorder %s28, %s31
      %p37 = scmp.eq.s32.totalorder %s18, 0
      %p38 = por %p36, %p37
      %p39 = scmp.ne.s32.totalorder %s28, %s31
      %p40 = scmp.eq.s32.totalorder %s23, 1
      %p41 = por %p39, %p40
      %p42 = scmp.ne.s32.totalorder %s31, %s32
      %p43 = scmp.eq.s32.totalorder %s23, 0
      %p44 = por %p42, %p43
      %p45 = scmp.ne.s32.totalorder %s31, %s32
      %p46 = scmp.eq.s32.totalorder %s24, 1
      %p47 = por %p45, %p46
      %p49 = scmp.ne.s32.totalorder %s32, %s48
      %p50 = scmp.eq.s32.totalorder %s24, 0
      %p51 = por %p49, %p50
      %s53 = sadd.s32 %s52, 1
      %p56 = scmp.eq.s32.totalorder %s18, 1
      %p57 = scmp.ne.s32.totalorder %s52, %s54
      %p58 = scmp.eq.s32.totalorder %s18, 0
      %p59 = por %p57, %p58
      %p60 = scmp.ne.s32.totalorder %s52, %s54
      %p61 = scmp.eq.s32.totalorder %s23, 1
      %p62 = por %p60, %p61
      %p63 = scmp.ne.s32.totalorder %s54, %s55
      %p64 = scmp.eq.s32.totalorder %s23, 0
      %p65 = por %p63, %p64
      %p66 = scmp.ne.s32.totalorder %s54, %s55
      %p67 = scmp.eq.s32.totalorder %s24, 1
      %p68 = por %p66, %p67
      %p70 = scmp.ne.s32.totalorder %s55, %s69
      %p71 = scmp.eq.s32.totalorder %s24, 0
      %p72 = por %p70, %p71
      %s74 = sadd.s32 %s73, 1
      %p77 = scmp.eq.s32.totalorder %s18, 1
      %p78 = scmp.ne.s32.totalorder %s73, %s75
      %p79 = scmp.eq.s32.totalorder %s18, 0
      %p80 = por %p78, %p79
      %p81 = scmp.ne.s32.totalorder %s73, %s75
      %p82 = scmp.eq.s32.totalorder %s23, 1
      %p83 = por %p81, %p82
      %p84 = scmp.ne.s32.totalorder %s75, %s76
      %p85 = scmp.eq.s32.totalorder %s23, 0
      %p86 = por %p84, %p85
      %p87 = scmp.ne.s32.totalorder %s75, %s76
      %p88 = scmp.eq.s32.totalorder %s24, 1
      %p89 = por %p87, %p88
      %p91 = scmp.ne.s32.totalorder %s76, %s90
      %p92 = scmp.eq.s32.totalorder %s24, 0
      %p93 = por %p91, %p92
      %s95 = sadd.s32 %s94, 1
      %p98 = scmp.eq.s32.totalorder %s18, 1
      %p99 = scmp.ne.s32.totalorder %s94, %s96
      %p100 = scmp.eq.s32.totalorder %s18, 0
      %p101 = por %p99, %p100
      %p102 = scmp.ne.s32.totalorder %s94, %s96
      %p103 = scmp.eq.s32.totalorder %s23, 1
      %p104 = por %p102, %p103
      %p105 = scmp.ne.s32.totalorder %s96, %s97
      %p106 = scmp.eq.s32.totalorder %s23, 0
      %p107 = por %p105, %p106
      %p108 = scmp.ne.s32.totalorder %s96, %s97
      %p109 = scmp.eq.s32.totalorder %s24, 1
      %p110 = por %p108, %p109
      %p112 = scmp.ne.s32.totalorder %s97, %s111
      %p113 = scmp.eq.s32.totalorder %s24, 0
      %p114 = por %p112, %p113
      %s116 = sadd.s32 %s115, 1
      %p119 = scmp.eq.s32.totalorder %s18, 1
      %p120 = scmp.ne.s32.totalorder %s115, %s117
      %p121 = scmp.eq.s32.totalorder %s18, 0
      %p122 = por %p120, %p121
      %p123 = scmp.ne.s32.totalorder %s115, %s117
      %p124 = scmp.eq.s32.totalorder %s23, 1
      %p125 = por %p123, %p124
      %p126 = scmp.ne.s32.totalorder %s117, %s118
      %p127 = scmp.eq.s32.totalorder %s23, 0
      %p128 = por %p126, %p127
      %p129 = scmp.ne.s32.totalorder %s117, %s118
      %p130 = scmp.eq.s32.totalorder %s24, 1
      %p131 = por %p129, %p130
      %p133 = scmp.ne.s32.totalorder %s118, %s132
      %p134 = scmp.eq.s32.totalorder %s24, 0
      %p135 = por %p133, %p134
      %s136 = ssub.s32 %s18, %s25
      %p137 = scmp.eq.s32.totalorder %s136, 0
      %s139 = sadd.s32 %s138, 1
      %s140 = scalar_select %p137, %s138, %s139
      %p143 = pneg %p137
      %p144 = scmp.eq.s32.totalorder %s18, 1
      %p145 = por %p143, %p144
      %p146 = scmp.ne.s32.totalorder %s138, %s141
      %p147 = scmp.eq.s32.totalorder %s18, 0
      %p148 = por %p146, %p147
      %p149 = scmp.ne.s32.totalorder %s138, %s141
      %p150 = scmp.eq.s32.totalorder %s23, 1
      %p151 = por %p149, %p150
      %p152 = scmp.ne.s32.totalorder %s141, %s142
      %p153 = scmp.eq.s32.totalorder %s23, 0
      %p154 = por %p152, %p153
      %p155 = scmp.ne.s32.totalorder %s141, %s142
      %p156 = scmp.eq.s32.totalorder %s24, 1
      %p157 = por %p155, %p156
      %p159 = scmp.ne.s32.totalorder %s142, %s158
      %p160 = scmp.eq.s32.totalorder %s24, 0
      %p161 = por %p159, %p160
      %p162 = scmp.le.s32.totalorder 1, %s18
      %p163 = scmp.lt.s32.totalorder %s18, 3
      %p164 = pnand %p162, %p163
      %p165 = pneg %p164
      // Predicated region
      $region9: #{tpu_custom_call.1} parent=5 // pred_check
        _
      $region10: #{tpu_custom_call.1} parent=5 // pred_check_branch
        %167 = sbr.rel (%p164) target = $region12
      $region11: #{tpu_custom_call.1} parent=5 // pred_region
        %s168 = ssub.s32 %s18, 1
        // Predicated region
        $region13: #{tpu_custom_call.1} parent=11 // pred_check
          %p169 = pneg %p65
        $region14: #{tpu_custom_call.1} parent=11 // pred_check_branch
          %171 = sbr.rel (%p169) target = $region16
        $region15: #{tpu_custom_call.1} parent=11 // pred_region
          %s173 = ssub.s32 3072, 3072
          %174 = vsyncadd [#allocation6], %s173
          %s175 = sshll.u32 [#allocation5], 4
          %s176 = int_to_ptr.vmem [resolvable:$true] %s175
          %181 = dma.hbm_to_vmem [thread:$0]  %s1, 3072, %s176, [#allocation6], 128, 128, 8
        $region16: #{tpu_custom_call.1} parent=11 // pred_fallthru
          _
        // Predicated region
        $region17: #{tpu_custom_call.1} parent=11 // pred_check
          %p182 = pneg %p86
        $region18: #{tpu_custom_call.1} parent=11 // pred_check_branch
          %184 = sbr.rel (%p182) target = $region20
        $region19: #{tpu_custom_call.1} parent=11 // pred_region
          _
        $region20: #{tpu_custom_call.1} parent=11 // pred_fallthru
          _
        // Predicated region
        $region21: #{tpu_custom_call.1} parent=11 // pred_check
          %p185 = pneg %p107
        $region22: #{tpu_custom_call.1} parent=11 // pred_check_branch
          %187 = sbr.rel (%p185) target = $region24
        $region23: #{tpu_custom_call.1} parent=11 // pred_region
          %s189 = ssub.s32 3072, 3072
          %190 = vsyncadd [#allocation6], %s189
          %s191 = sshll.u32 [#allocation7], 4
          %s192 = int_to_ptr.vmem [resolvable:$true] %s191
          %197 = dma.hbm_to_vmem [thread:$0]  %s3, 3072, %s192, [#allocation6], 128, 128, 8
        $region24: #{tpu_custom_call.1} parent=11 // pred_fallthru
          _
        // Predicated region
        $region25: #{tpu_custom_call.1} parent=11 // pred_check
          %p198 = pneg %p128
        $region26: #{tpu_custom_call.1} parent=11 // pred_check_branch
          %200 = sbr.rel (%p198) target = $region28
        $region27: #{tpu_custom_call.1} parent=11 // pred_region
          _
        $region28: #{tpu_custom_call.1} parent=11 // pred_fallthru
          _
      $region12: #{tpu_custom_call.1} parent=5 // pred_fallthru
        _
      %p201 = scmp.lt.s32.totalorder %s18, 2
      // Predicated region
      $region29: #{tpu_custom_call.1} parent=5 // pred_check
        %p202 = pneg %p201
      $region30: #{tpu_custom_call.1} parent=5 // pred_check_branch
        %204 = sbr.rel (%p202) target = $region32
      $region31: #{tpu_custom_call.1} parent=5 // pred_region
        // Predicated region
        $region33: #{tpu_custom_call.1} parent=31 // pred_check
          %p205 = pneg %p38
        $region34: #{tpu_custom_call.1} parent=31 // pred_check_branch
          %207 = sbr.rel (%p205) target = $region36
        $region35: #{tpu_custom_call.1} parent=31 // pred_region
          %s208 = sand.u32 %s28, 1
          %s209 = scalar_lea.sflag [#allocation3], %s208
          %s210 = sand.u32 %s28, 1
          %s211 = smul.addr %s210, 8
          %s212 = scalar_lea.vmem [#allocation2], %s211
          %s214 = ssub.s32 128, 128
          %215 = vsyncadd %s209, %s214
          %s216 = smul.addr %s18, 128
          %s217 = scalar_lea.hbm %s0, %s216
          %s219 = sshll.u32 %s212, 4
          %s220 = int_to_ptr.vmem [resolvable:$true] %s219
          %222 = dma.hbm_to_vmem [thread:$0]  %s217, 128, %s220, %s209
        $region36: #{tpu_custom_call.1} parent=31 // pred_fallthru
          _
      $region32: #{tpu_custom_call.1} parent=5 // pred_fallthru
        _
      %p223 = scmp.le.s32.totalorder 1, %s18
      %p224 = scmp.lt.s32.totalorder %s18, 3
      %p225 = pnand %p223, %p224
      %p226 = pneg %p225
      // Predicated region
      $region37: #{tpu_custom_call.1} parent=5 // pred_check
        _
      $region38: #{tpu_custom_call.1} parent=5 // pred_check_branch
        %228 = sbr.rel (%p225) target = $region40
      $region39: #{tpu_custom_call.1} parent=5 // pred_region
        %s229 = ssub.s32 %s18, 1
        %s230 = sand.u32 %s31, 1
        %s231 = scalar_lea.sflag [#allocation3], %s230
        %s232 = sand.u32 %s31, 1
        %s233 = smul.addr %s232, 8
        %s234 = scalar_lea.vmem [#allocation2], %s233
        // Predicated region
        $region41: #{tpu_custom_call.1} parent=39 // pred_check
          %p235 = pneg %p44
        $region42: #{tpu_custom_call.1} parent=39 // pred_check_branch
          %237 = sbr.rel (%p235) target = $region44
        $region43: #{tpu_custom_call.1} parent=39 // pred_region
          %238 = dma.done %s231, 128
        $region44: #{tpu_custom_call.1} parent=39 // pred_fallthru
          _
        // Predicated region
        $region45: #{tpu_custom_call.1} parent=39 // pred_check
          %p239 = pneg %p65
        $region46: #{tpu_custom_call.1} parent=39 // pred_check_branch
          %241 = sbr.rel (%p239) target = $region48
        $region47: #{tpu_custom_call.1} parent=39 // pred_region
          %242 = dma.done [#allocation6], 3072
        $region48: #{tpu_custom_call.1} parent=39 // pred_fallthru
          _
        // Predicated region
        $region49: #{tpu_custom_call.1} parent=39 // pred_check
          %p243 = pneg %p107
        $region50: #{tpu_custom_call.1} parent=39 // pred_check_branch
          %245 = sbr.rel (%p243) target = $region52
        $region51: #{tpu_custom_call.1} parent=39 // pred_region
          %246 = dma.done [#allocation6], 3072
        $region52: #{tpu_custom_call.1} parent=39 // pred_fallthru
          _
        %s247 = sand.u32 %s31, 1
        %s248 = scalar_lea.sflag [#allocation3], %s247
        %s249 = sand.u32 %s31, 1
        %s250 = smul.addr %s249, 8
        %s251 = scalar_lea.vmem [#allocation2], %s250
        %p252 = pneg %p44
        %p253 = pneg %p41
        %p254 = pneg %p65
        %p255 = pneg %p62
        %p256 = pneg %p86
        %p257 = pneg %p83
        %p258 = pneg %p107
        %p259 = pneg %p104
        %p260 = pneg %p128
        %p261 = pneg %p125
        %p262 = pneg %p154
        %p263 = pneg %p151
        %s264 = sand.u32 %s141, 1
        %s265 = scalar_lea.sflag [#allocation4], %s264
        %s266 = sand.u32 %s141, 1
        %s267 = smul.addr %s266, 8
        %s268 = scalar_lea.vmem [#allocation8], %s267
        %v269 = vld [vmem:[%s234] sm:$0xff]
        %v270 = vld [vmem:[#allocation5] sm:$0xff]
        %v271 = vld [vmem:[#allocation5 + $0x8] sm:$0xff]
        %v272 = vld [vmem:[#allocation5 + $0x10] sm:$0xff]
        %v273 = vld [vmem:[#allocation5 + $0x18] sm:$0xff]
        %v274 = vld [vmem:[#allocation5 + $0x20] sm:$0xff]
        %v275 = vld [vmem:[#allocation5 + $0x28] sm:$0xff]
        %v276 = vld [vmem:[#allocation5 + $0x30] sm:$0xff]
        %v277 = vld [vmem:[#allocation5 + $0x38] sm:$0xff]
        %v278 = vld [vmem:[%s2] sm:$0x1]
        %v280 = vlaneseq
        %v281 = vshrl.u32 %v280, 7
        %v282 = vsub.s32 0, %v281
        %v283 = vrot.slane %v278, %v282
        %vm285 = vcmask 523264
        %v287 = vsel %vm285, %v269, 0
        %289 = vmatprep.subr.mxu0 0.0
        %290 = vmatpush1.msra.mxu0 %v270
        %291 = vmatprep.subr.mxu0 0.0
        %292 = vmatpush1.msra.mxu0 %v271
        %293 = vmatprep.subr.mxu0 0.0
        %294 = vmatpush1.msra.mxu0 %v272
        %295 = vmatprep.subr.mxu0 0.0
        %296 = vmatpush1.msra.mxu0 %v273
        %297 = vmatprep.subr.mxu0 0.0
        %298 = vmatpush1.msra.mxu0 %v274
        %299 = vmatprep.subr.mxu0 0.0
        %300 = vmatpush1.msra.mxu0 %v275
        %301 = vmatprep.subr.mxu0 0.0
        %302 = vmatpush1.msra.mxu0 %v276
        %303 = vmatprep.subr.mxu0 0.0
        %304 = vmatpush1.msra.mxu0 %v277
        %305 = vmatprep.subr.mxu0 0.0
        %306 = vmatpush1.msra.mxu0 0.0
        %307 = vmatprep.subr.mxu0 0.0
        %308 = vmatpush1.msra.mxu0 0.0
        %309 = vmatprep.subr.mxu0 0.0
        %310 = vmatpush1.msra.mxu0 0.0
        %311 = vmatprep.subr.mxu0 0.0
        %312 = vmatpush1.msra.mxu0 0.0
        %313 = vmatprep.subr.mxu0 0.0
        %314 = vmatpush1.msra.mxu0 0.0
        %315 = vmatprep.subr.mxu0 0.0
        %316 = vmatpush1.msra.mxu0 0.0
        %317 = vmatprep.subr.mxu0 0.0
        %318 = vmatpush1.msra.mxu0 0.0
        %319 = vmatprep.subr.mxu0 0.0
        %320 = vmatpush1.msra.mxu0 0.0
        %321 = vmatprep.subr.mxu0 0.0
        %322 = vmatpush1.msra.mxu0 0.0
        %323 = vmatprep.subr.mxu0 0.0
        %324 = vmatpush1.msra.mxu0 0.0
        %325 = vmatprep.subr.mxu0 0.0
        %326 = vmatpush1.msra.mxu0 0.0
        %327 = vmatprep.subr.mxu0 0.0
        %328 = vmatpush1.msra.mxu0 0.0
        %329 = vmatprep.subr.mxu0 0.0
        %330 = vmatpush1.msra.mxu0 0.0
        %331 = vmatprep.subr.mxu0 0.0
        %332 = vmatpush1.msra.mxu0 0.0
        %333 = vmatprep.subr.mxu0 0.0
        %334 = vmatpush1.msra.mxu0 0.0
        %335 = vmatprep.subr.mxu0 0.0
        %336 = vmatpush1.msra.mxu0 0.0
        %337 = vmatprep.subr.mxu0 0.0
        %338 = vmatpush1.msra.mxu0 0.0
        %339 = vmatprep.subr.mxu0 0.0
        %340 = vmatpush1.msra.mxu0 0.0
        %341 = vmatprep.subr.mxu0 0.0
        %342 = vmatpush1.msra.mxu0 0.0
        %343 = vmatprep.subr.mxu0 0.0
        %344 = vmatpush1.msra.mxu0 0.0
        %345 = vmatprep.subr.mxu0 0.0
        %346 = vmatpush1.msra.mxu0 0.0
        %347 = vmatprep.subr.mxu0 0.0
        %348 = vmatpush1.msra.mxu0 0.0
        %349 = vmatprep.subr.mxu0 0.0
        %350 = vmatpush1.msra.mxu0 0.0
        %351 = vmatprep.subr.mxu0 0.0
        %352 = vmatpush1.msra.mxu0 0.0
        %353 = vmatprep.mubr.f32.mxu0 0.0
        %354 = vmatmul.mubr.f32.gmra.mrb[0].mxu0 %v287
        %v355 = vpop.f32.mrb[0].mxu0
        %v356 = vadd.f32 %v283, %v355
        %v357 = vpop.f32.mrb[0].mxu0
        %358 = vdwg.mxu0
        %v359 = vmax.f32 %v356, 0.0
        %v360 = vld [vmem:[#allocation7] sm:$0xff]
        %v361 = vld [vmem:[#allocation7 + $0x8] sm:$0xff]
        %v362 = vld [vmem:[#allocation7 + $0x10] sm:$0xff]
        %v363 = vld [vmem:[#allocation7 + $0x18] sm:$0xff]
        %v364 = vld [vmem:[#allocation7 + $0x20] sm:$0xff]
        %v365 = vld [vmem:[#allocation7 + $0x28] sm:$0xff]
        %v366 = vld [vmem:[#allocation7 + $0x30] sm:$0xff]
        %v367 = vld [vmem:[#allocation7 + $0x38] sm:$0xff]
        %s368 = scalar_lea.vmem [#allocation5], 64
        %v369 = vld [vmem:[%s368] sm:$0xff]
        %v370 = vld [vmem:[%s368 + $0x8] sm:$0xff]
        %v371 = vld [vmem:[%s368 + $0x10] sm:$0xff]
        %v372 = vld [vmem:[%s368 + $0x18] sm:$0xff]
        %v373 = vld [vmem:[%s368 + $0x20] sm:$0xff]
        %v374 = vld [vmem:[%s368 + $0x28] sm:$0xff]
        %v375 = vld [vmem:[%s368 + $0x30] sm:$0xff]
        %v376 = vld [vmem:[%s368 + $0x38] sm:$0xff]
        %s377 = scalar_lea.vmem %s2, 1
        %v378 = vld [vmem:[%s377] sm:$0x1]
        %v380 = vlaneseq
        %v381 = vshrl.u32 %v380, 7
        %v382 = vsub.s32 0, %v381
        %v383 = vrot.slane %v378, %v382
        %385 = vmatprep.subr.mxu0 0.0
        %386 = vmatpush1.msra.mxu0 %v369
        %387 = vmatprep.subr.mxu0 0.0
        %388 = vmatpush1.msra.mxu0 %v370
        %389 = vmatprep.subr.mxu0 0.0
        %390 = vmatpush1.msra.mxu0 %v371
        %391 = vmatprep.subr.mxu0 0.0
        %392 = vmatpush1.msra.mxu0 %v372
        %393 = vmatprep.subr.mxu0 0.0
        %394 = vmatpush1.msra.mxu0 %v373
        %395 = vmatprep.subr.mxu0 0.0
        %396 = vmatpush1.msra.mxu0 %v374
        %397 = vmatprep.subr.mxu0 0.0
        %398 = vmatpush1.msra.mxu0 %v375
        %399 = vmatprep.subr.mxu0 0.0
        %400 = vmatpush1.msra.mxu0 %v376
        %401 = vmatprep.subr.mxu0 0.0
        %402 = vmatpush1.msra.mxu0 0.0
        %403 = vmatprep.subr.mxu0 0.0
        %404 = vmatpush1.msra.mxu0 0.0
        %405 = vmatprep.subr.mxu0 0.0
        %406 = vmatpush1.msra.mxu0 0.0
        %407 = vmatprep.subr.mxu0 0.0
        %408 = vmatpush1.msra.mxu0 0.0
        %409 = vmatprep.subr.mxu0 0.0
        %410 = vmatpush1.msra.mxu0 0.0
        %411 = vmatprep.subr.mxu0 0.0
        %412 = vmatpush1.msra.mxu0 0.0
        %413 = vmatprep.subr.mxu0 0.0
        %414 = vmatpush1.msra.mxu0 0.0
        %415 = vmatprep.subr.mxu0 0.0
        %416 = vmatpush1.msra.mxu0 0.0
        %417 = vmatprep.subr.mxu0 0.0
        %418 = vmatpush1.msra.mxu0 0.0
        %419 = vmatprep.subr.mxu0 0.0
        %420 = vmatpush1.msra.mxu0 0.0
        %421 = vmatprep.subr.mxu0 0.0
        %422 = vmatpush1.msra.mxu0 0.0
        %423 = vmatprep.subr.mxu0 0.0
        %424 = vmatpush1.msra.mxu0 0.0
        %425 = vmatprep.subr.mxu0 0.0
        %426 = vmatpush1.msra.mxu0 0.0
        %427 = vmatprep.subr.mxu0 0.0
        %428 = vmatpush1.msra.mxu0 0.0
        %429 = vmatprep.subr.mxu0 0.0
        %430 = vmatpush1.msra.mxu0 0.0
        %431 = vmatprep.subr.mxu0 0.0
        %432 = vmatpush1.msra.mxu0 0.0
        %433 = vmatprep.subr.mxu0 0.0
        %434 = vmatpush1.msra.mxu0 0.0
        %435 = vmatprep.subr.mxu0 0.0
        %436 = vmatpush1.msra.mxu0 0.0
        %437 = vmatprep.subr.mxu0 0.0
        %438 = vmatpush1.msra.mxu0 0.0
        %439 = vmatprep.subr.mxu0 0.0
        %440 = vmatpush1.msra.mxu0 0.0
        %441 = vmatprep.subr.mxu0 0.0
        %442 = vmatpush1.msra.mxu0 0.0
        %443 = vmatprep.subr.mxu0 0.0
        %444 = vmatpush1.msra.mxu0 0.0
        %445 = vmatprep.subr.mxu0 0.0
        %446 = vmatpush1.msra.mxu0 0.0
        %447 = vmatprep.subr.mxu0 0.0
        %448 = vmatpush1.msra.mxu0 0.0
        %449 = vmatprep.mubr.f32.mxu0 0.0
        %450 = vmatmul.mubr.f32.gmra.mrb[0].mxu0 %v287
        %v451 = vpop.f32.mrb[0].mxu0
        %v452 = vadd.f32 %v383, %v451
        %v453 = vpop.f32.mrb[0].mxu0
        %454 = vdwg.mxu0
        %v455 = vmax.f32 %v452, 0.0
        %s456 = scalar_lea.vmem [#allocation7], 64
        %v457 = vld [vmem:[%s456] sm:$0xff]
        %v458 = vld [vmem:[%s456 + $0x8] sm:$0xff]
        %v459 = vld [vmem:[%s456 + $0x10] sm:$0xff]
        %v460 = vld [vmem:[%s456 + $0x18] sm:$0xff]
        %v461 = vld [vmem:[%s456 + $0x20] sm:$0xff]
        %v462 = vld [vmem:[%s456 + $0x28] sm:$0xff]
        %v463 = vld [vmem:[%s456 + $0x30] sm:$0xff]
        %v464 = vld [vmem:[%s456 + $0x38] sm:$0xff]
        %v466 = vsel %vm285, %v455, 0
        %468 = vmatprep.subr.mxu0 0.0
        %469 = vmatpush1.msra.mxu0 %v457
        %470 = vmatprep.subr.mxu0 0.0
        %471 = vmatpush1.msra.mxu0 %v458
        %472 = vmatprep.subr.mxu0 0.0
        %473 = vmatpush1.msra.mxu0 %v459
        %474 = vmatprep.subr.mxu0 0.0
        %475 = vmatpush1.msra.mxu0 %v460
        %476 = vmatprep.subr.mxu0 0.0
        %477 = vmatpush1.msra.mxu0 %v461
        %478 = vmatprep.subr.mxu0 0.0
        %479 = vmatpush1.msra.mxu0 %v462
        %480 = vmatprep.subr.mxu0 0.0
        %481 = vmatpush1.msra.mxu0 %v463
        %482 = vmatprep.subr.mxu0 0.0
        %483 = vmatpush1.msra.mxu0 %v464
        %484 = vmatprep.subr.mxu0 0.0
        %485 = vmatpush1.msra.mxu0 0.0
        %486 = vmatprep.subr.mxu0 0.0
        %487 = vmatpush1.msra.mxu0 0.0
        %488 = vmatprep.subr.mxu0 0.0
        %489 = vmatpush1.msra.mxu0 0.0
        %490 = vmatprep.subr.mxu0 0.0
        %491 = vmatpush1.msra.mxu0 0.0
        %492 = vmatprep.subr.mxu0 0.0
        %493 = vmatpush1.msra.mxu0 0.0
        %494 = vmatprep.subr.mxu0 0.0
        %495 = vmatpush1.msra.mxu0 0.0
        %496 = vmatprep.subr.mxu0 0.0
        %497 = vmatpush1.msra.mxu0 0.0
        %498 = vmatprep.subr.mxu0 0.0
        %499 = vmatpush1.msra.mxu0 0.0
        %500 = vmatprep.subr.mxu0 0.0
        %501 = vmatpush1.msra.mxu0 0.0
        %502 = vmatprep.subr.mxu0 0.0
        %503 = vmatpush1.msra.mxu0 0.0
        %504 = vmatprep.subr.mxu0 0.0
        %505 = vmatpush1.msra.mxu0 0.0
        %506 = vmatprep.subr.mxu0 0.0
        %507 = vmatpush1.msra.mxu0 0.0
        %508 = vmatprep.subr.mxu0 0.0
        %509 = vmatpush1.msra.mxu0 0.0
        %510 = vmatprep.subr.mxu0 0.0
        %511 = vmatpush1.msra.mxu0 0.0
        %512 = vmatprep.subr.mxu0 0.0
        %513 = vmatpush1.msra.mxu0 0.0
        %514 = vmatprep.subr.mxu0 0.0
        %515 = vmatpush1.msra.mxu0 0.0
        %516 = vmatprep.subr.mxu0 0.0
        %517 = vmatpush1.msra.mxu0 0.0
        %518 = vmatprep.subr.mxu0 0.0
        %519 = vmatpush1.msra.mxu0 0.0
        %520 = vmatprep.subr.mxu0 0.0
        %521 = vmatpush1.msra.mxu0 0.0
        %522 = vmatprep.subr.mxu0 0.0
        %523 = vmatpush1.msra.mxu0 0.0
        %524 = vmatprep.subr.mxu0 0.0
        %525 = vmatpush1.msra.mxu0 0.0
        %526 = vmatprep.subr.mxu0 0.0
        %527 = vmatpush1.msra.mxu0 0.0
        %528 = vmatprep.subr.mxu0 0.0
        %529 = vmatpush1.msra.mxu0 0.0
        %530 = vmatprep.subr.mxu0 0.0
        %531 = vmatpush1.msra.mxu0 0.0
        %532 = vmatprep.mubr.f32.mxu0 0.0
        %533 = vmatmul.mubr.f32.gmra.mrb[0].mxu0 %v466
        %v534 = vpop.f32.mrb[0].mxu0
        %v535 = vadd.f32 0.0, %v534
        %v536 = vpop.f32.mrb[0].mxu0
        %537 = vdwg.mxu0
        %v539 = vsel %vm285, %v359, 0
        %541 = vmatprep.subr.mxu0 0.0
        %542 = vmatpush1.msra.mxu0 %v360
        %543 = vmatprep.subr.mxu0 0.0
        %544 = vmatpush1.msra.mxu0 %v361
        %545 = vmatprep.subr.mxu0 0.0
        %546 = vmatpush1.msra.mxu0 %v362
        %547 = vmatprep.subr.mxu0 0.0
        %548 = vmatpush1.msra.mxu0 %v363
        %549 = vmatprep.subr.mxu0 0.0
        %550 = vmatpush1.msra.mxu0 %v364
        %551 = vmatprep.subr.mxu0 0.0
        %552 = vmatpush1.msra.mxu0 %v365
        %553 = vmatprep.subr.mxu0 0.0
        %554 = vmatpush1.msra.mxu0 %v366
        %555 = vmatprep.subr.mxu0 0.0
        %556 = vmatpush1.msra.mxu0 %v367
        %557 = vmatprep.subr.mxu0 0.0
        %558 = vmatpush1.msra.mxu0 0.0
        %559 = vmatprep.subr.mxu0 0.0
        %560 = vmatpush1.msra.mxu0 0.0
        %561 = vmatprep.subr.mxu0 0.0
        %562 = vmatpush1.msra.mxu0 0.0
        %563 = vmatprep.subr.mxu0 0.0
        %564 = vmatpush1.msra.mxu0 0.0
        %565 = vmatprep.subr.mxu0 0.0
        %566 = vmatpush1.msra.mxu0 0.0
        %567 = vmatprep.subr.mxu0 0.0
        %568 = vmatpush1.msra.mxu0 0.0
        %569 = vmatprep.subr.mxu0 0.0
        %570 = vmatpush1.msra.mxu0 0.0
        %571 = vmatprep.subr.mxu0 0.0
        %572 = vmatpush1.msra.mxu0 0.0
        %573 = vmatprep.subr.mxu0 0.0
        %574 = vmatpush1.msra.mxu0 0.0
        %575 = vmatprep.subr.mxu0 0.0
        %576 = vmatpush1.msra.mxu0 0.0
        %577 = vmatprep.subr.mxu0 0.0
        %578 = vmatpush1.msra.mxu0 0.0
        %579 = vmatprep.subr.mxu0 0.0
        %580 = vmatpush1.msra.mxu0 0.0
        %581 = vmatprep.subr.mxu0 0.0
        %582 = vmatpush1.msra.mxu0 0.0
        %583 = vmatprep.subr.mxu0 0.0
        %584 = vmatpush1.msra.mxu0 0.0
        %585 = vmatprep.subr.mxu0 0.0
        %586 = vmatpush1.msra.mxu0 0.0
        %587 = vmatprep.subr.mxu0 0.0
        %588 = vmatpush1.msra.mxu0 0.0
        %589 = vmatprep.subr.mxu0 0.0
        %590 = vmatpush1.msra.mxu0 0.0
        %591 = vmatprep.subr.mxu0 0.0
        %592 = vmatpush1.msra.mxu0 0.0
        %593 = vmatprep.subr.mxu0 0.0
        %594 = vmatpush1.msra.mxu0 0.0
        %595 = vmatprep.subr.mxu0 0.0
        %596 = vmatpush1.msra.mxu0 0.0
        %597 = vmatprep.subr.mxu0 0.0
        %598 = vmatpush1.msra.mxu0 0.0
        %599 = vmatprep.subr.mxu0 0.0
        %600 = vmatpush1.msra.mxu0 0.0
        %601 = vmatprep.subr.mxu0 0.0
        %602 = vmatpush1.msra.mxu0 0.0
        %603 = vmatprep.subr.mxu0 0.0
        %604 = vmatpush1.msra.mxu0 0.0
        %605 = vmatprep.mubr.f32.mxu0 0.0
        %606 = vmatmul.mubr.f32.gmra.mrb[0].mxu0 %v539
        %v607 = vpop.f32.mrb[0].mxu0
        %v608 = vadd.f32 %v535, %v607
        %v609 = vpop.f32.mrb[0].mxu0
        %610 = vdwg.mxu0
        %s611 = scalar_lea.vmem [#allocation5], 128
        %v612 = vld [vmem:[%s611] sm:$0xff]
        %v613 = vld [vmem:[%s611 + $0x8] sm:$0xff]
        %v614 = vld [vmem:[%s611 + $0x10] sm:$0xff]
        %v615 = vld [vmem:[%s611 + $0x18] sm:$0xff]
        %v616 = vld [vmem:[%s611 + $0x20] sm:$0xff]
        %v617 = vld [vmem:[%s611 + $0x28] sm:$0xff]
        %v618 = vld [vmem:[%s611 + $0x30] sm:$0xff]
        %v619 = vld [vmem:[%s611 + $0x38] sm:$0xff]
        %s620 = scalar_lea.vmem %s2, 2
        %v621 = vld [vmem:[%s620] sm:$0x1]
        %v623 = vlaneseq
        %v624 = vshrl.u32 %v623, 7
        %v625 = vsub.s32 0, %v624
        %v626 = vrot.slane %v621, %v625
        %628 = vmatprep.subr.mxu0 0.0
        %629 = vmatpush1.msra.mxu0 %v612
        %630 = vmatprep.subr.mxu0 0.0
        %631 = vmatpush1.msra.mxu0 %v613
        %632 = vmatprep.subr.mxu0 0.0
        %633 = vmatpush1.msra.mxu0 %v614
        %634 = vmatprep.subr.mxu0 0.0
        %635 = vmatpush1.msra.mxu0 %v615
        %636 = vmatprep.subr.mxu0 0.0
        %637 = vmatpush1.msra.mxu0 %v616
        %638 = vmatprep.subr.mxu0 0.0
        %639 = vmatpush1.msra.mxu0 %v617
        %640 = vmatprep.subr.mxu0 0.0
        %641 = vmatpush1.msra.mxu0 %v618
        %642 = vmatprep.subr.mxu0 0.0
        %643 = vmatpush1.msra.mxu0 %v619
        %644 = vmatprep.subr.mxu0 0.0
        %645 = vmatpush1.msra.mxu0 0.0
        %646 = vmatprep.subr.mxu0 0.0
        %647 = vmatpush1.msra.mxu0 0.0
        %648 = vmatprep.subr.mxu0 0.0
        %649 = vmatpush1.msra.mxu0 0.0
        %650 = vmatprep.subr.mxu0 0.0
        %651 = vmatpush1.msra.mxu0 0.0
        %652 = vmatprep.subr.mxu0 0.0
        %653 = vmatpush1.msra.mxu0 0.0
        %654 = vmatprep.subr.mxu0 0.0
        %655 = vmatpush1.msra.mxu0 0.0
        %656 = vmatprep.subr.mxu0 0.0
        %657 = vmatpush1.msra.mxu0 0.0
        %658 = vmatprep.subr.mxu0 0.0
        %659 = vmatpush1.msra.mxu0 0.0
        %660 = vmatprep.subr.mxu0 0.0
        %661 = vmatpush1.msra.mxu0 0.0
        %662 = vmatprep.subr.mxu0 0.0
        %663 = vmatpush1.msra.mxu0 0.0
        %664 = vmatprep.subr.mxu0 0.0
        %665 = vmatpush1.msra.mxu0 0.0
        %666 = vmatprep.subr.mxu0 0.0
        %667 = vmatpush1.msra.mxu0 0.0
        %668 = vmatprep.subr.mxu0 0.0
        %669 = vmatpush1.msra.mxu0 0.0
        %670 = vmatprep.subr.mxu0 0.0
        %671 = vmatpush1.msra.mxu0 0.0
        %672 = vmatprep.subr.mxu0 0.0
        %673 = vmatpush1.msra.mxu0 0.0
        %674 = vmatprep.subr.mxu0 0.0
        %675 = vmatpush1.msra.mxu0 0.0
        %676 = vmatprep.subr.mxu0 0.0
        %677 = vmatpush1.msra.mxu0 0.0
        %678 = vmatprep.subr.mxu0 0.0
        %679 = vmatpush1.msra.mxu0 0.0
        %680 = vmatprep.subr.mxu0 0.0
        %681 = vmatpush1.msra.mxu0 0.0
        %682 = vmatprep.subr.mxu0 0.0
        %683 = vmatpush1.msra.mxu0 0.0
        %684 = vmatprep.subr.mxu0 0.0
        %685 = vmatpush1.msra.mxu0 0.0
        %686 = vmatprep.subr.mxu0 0.0
        %687 = vmatpush1.msra.mxu0 0.0
        %688 = vmatprep.subr.mxu0 0.0
        %689 = vmatpush1.msra.mxu0 0.0
        %690 = vmatprep.subr.mxu0 0.0
        %691 = vmatpush1.msra.mxu0 0.0
        %692 = vmatprep.mubr.f32.mxu0 0.0
        %693 = vmatmul.mubr.f32.gmra.mrb[0].mxu0 %v287
        %v694 = vpop.f32.mrb[0].mxu0
        %v695 = vadd.f32 %v626, %v694
        %v696 = vpop.f32.mrb[0].mxu0
        %697 = vdwg.mxu0
        %v698 = vmax.f32 %v695, 0.0
        %s699 = scalar_lea.vmem [#allocation7], 128
        %v700 = vld [vmem:[%s699] sm:$0xff]
        %v701 = vld [vmem:[%s699 + $0x8] sm:$0xff]
        %v702 = vld [vmem:[%s699 + $0x10] sm:$0xff]
        %v703 = vld [vmem:[%s699 + $0x18] sm:$0xff]
        %v704 = vld [vmem:[%s699 + $0x20] sm:$0xff]
        %v705 = vld [vmem:[%s699 + $0x28] sm:$0xff]
        %v706 = vld [vmem:[%s699 + $0x30] sm:$0xff]
        %v707 = vld [vmem:[%s699 + $0x38] sm:$0xff]
        %v709 = vsel %vm285, %v698, 0
        %711 = vmatprep.subr.mxu0 0.0
        %712 = vmatpush1.msra.mxu0 %v700
        %713 = vmatprep.subr.mxu0 0.0
        %714 = vmatpush1.msra.mxu0 %v701
        %715 = vmatprep.subr.mxu0 0.0
        %716 = vmatpush1.msra.mxu0 %v702
        %717 = vmatprep.subr.mxu0 0.0
        %718 = vmatpush1.msra.mxu0 %v703
        %719 = vmatprep.subr.mxu0 0.0
        %720 = vmatpush1.msra.mxu0 %v704
        %721 = vmatprep.subr.mxu0 0.0
        %722 = vmatpush1.msra.mxu0 %v705
        %723 = vmatprep.subr.mxu0 0.0
        %724 = vmatpush1.msra.mxu0 %v706
        %725 = vmatprep.subr.mxu0 0.0
        %726 = vmatpush1.msra.mxu0 %v707
        %727 = vmatprep.subr.mxu0 0.0
        %728 = vmatpush1.msra.mxu0 0.0
        %729 = vmatprep.subr.mxu0 0.0
        %730 = vmatpush1.msra.mxu0 0.0
        %731 = vmatprep.subr.mxu0 0.0
        %732 = vmatpush1.msra.mxu0 0.0
        %733 = vmatprep.subr.mxu0 0.0
        %734 = vmatpush1.msra.mxu0 0.0
        %735 = vmatprep.subr.mxu0 0.0
        %736 = vmatpush1.msra.mxu0 0.0
        %737 = vmatprep.subr.mxu0 0.0
        %738 = vmatpush1.msra.mxu0 0.0
        %739 = vmatprep.subr.mxu0 0.0
        %740 = vmatpush1.msra.mxu0 0.0
        %741 = vmatprep.subr.mxu0 0.0
        %742 = vmatpush1.msra.mxu0 0.0
        %743 = vmatprep.subr.mxu0 0.0
        %744 = vmatpush1.msra.mxu0 0.0
        %745 = vmatprep.subr.mxu0 0.0
        %746 = vmatpush1.msra.mxu0 0.0
        %747 = vmatprep.subr.mxu0 0.0
        %748 = vmatpush1.msra.mxu0 0.0
        %749 = vmatprep.subr.mxu0 0.0
        %750 = vmatpush1.msra.mxu0 0.0
        %751 = vmatprep.subr.mxu0 0.0
        %752 = vmatpush1.msra.mxu0 0.0
        %753 = vmatprep.subr.mxu0 0.0
        %754 = vmatpush1.msra.mxu0 0.0
        %755 = vmatprep.subr.mxu0 0.0
        %756 = vmatpush1.msra.mxu0 0.0
        %757 = vmatprep.subr.mxu0 0.0
        %758 = vmatpush1.msra.mxu0 0.0
        %759 = vmatprep.subr.mxu0 0.0
        %760 = vmatpush1.msra.mxu0 0.0
        %761 = vmatprep.subr.mxu0 0.0
        %762 = vmatpush1.msra.mxu0 0.0
        %763 = vmatprep.subr.mxu0 0.0
        %764 = vmatpush1.msra.mxu0 0.0
        %765 = vmatprep.subr.mxu0 0.0
        %766 = vmatpush1.msra.mxu0 0.0
        %767 = vmatprep.subr.mxu0 0.0
        %768 = vmatpush1.msra.mxu0 0.0
        %769 = vmatprep.subr.mxu0 0.0
        %770 = vmatpush1.msra.mxu0 0.0
        %771 = vmatprep.subr.mxu0 0.0
        %772 = vmatpush1.msra.mxu0 0.0
        %773 = vmatprep.subr.mxu0 0.0
        %774 = vmatpush1.msra.mxu0 0.0
        %775 = vmatprep.mubr.f32.mxu0 0.0
        %776 = vmatmul.mubr.f32.gmra.mrb[0].mxu0 %v709
        %v777 = vpop.f32.mrb[0].mxu0
        %v778 = vadd.f32 0.0, %v777
        %v779 = vpop.f32.mrb[0].mxu0
        %780 = vdwg.mxu0
        %v781 = vadd.f32 %v608, %v778
        %v782 = vld [vmem:[%s4] sm:$0x1]
        %v784 = vlaneseq
        %v785 = vshrl.u32 %v784, 7
        %v786 = vsub.s32 0, %v785
        %v787 = vrot.slane %v782, %v786
        %v789 = vadd.f32 %v781, %v787
        %790 = vst [vmem:[%s268] sm:$0xff] %v789
        %s791 = sand.u32 %s141, 1
        %s792 = scalar_lea.sflag [#allocation4], %s791
        %s793 = sand.u32 %s141, 1
        %s794 = smul.addr %s793, 8
        %s795 = scalar_lea.vmem [#allocation8], %s794
        // Predicated region
        $region53: #{tpu_custom_call.1} parent=39 // pred_check
          %p796 = pneg %p151
        $region54: #{tpu_custom_call.1} parent=39 // pred_check_branch
          %798 = sbr.rel (%p796) target = $region56
        $region55: #{tpu_custom_call.1} parent=39 // pred_region
          %s800 = ssub.s32 128, 128
          %801 = vsyncadd %s792, %s800
          %s802 = smul.addr %s23, 128
          %s803 = scalar_lea.hbm %s5, %s802
          %s805 = sshll.u32 %s795, 4
          %s806 = int_to_ptr.vmem [resolvable:$true] %s805
          %808 = dma.vmem_to_hbm [thread:$0]  %s806, 128, %s803, %s792
        $region56: #{tpu_custom_call.1} parent=39 // pred_fallthru
          _
      $region40: #{tpu_custom_call.1} parent=5 // pred_fallthru
        _
      %p809 = scmp.le.s32.totalorder 2, %s18
      // Predicated region
      $region57: #{tpu_custom_call.1} parent=5 // pred_check
        %p810 = pneg %p809
      $region58: #{tpu_custom_call.1} parent=5 // pred_check_branch
        %812 = sbr.rel (%p810) target = $region60
      $region59: #{tpu_custom_call.1} parent=5 // pred_region
        %s813 = ssub.s32 %s18, 2
        // Predicated region
        $region61: #{tpu_custom_call.1} parent=59 // pred_check
          %p814 = pneg %p157
        $region62: #{tpu_custom_call.1} parent=59 // pred_check_branch
          %816 = sbr.rel (%p814) target = $region64
        $region63: #{tpu_custom_call.1} parent=59 // pred_region
          %s817 = sand.u32 %s142, 1
          %s818 = scalar_lea.sflag [#allocation4], %s817
          %s819 = sand.u32 %s142, 1
          %s820 = smul.addr %s819, 8
          %s821 = scalar_lea.vmem [#allocation8], %s820
          %822 = dma.done %s818, 128
        $region64: #{tpu_custom_call.1} parent=59 // pred_fallthru
          _
      $region60: #{tpu_custom_call.1} parent=5 // pred_fallthru
        _
    $region6: #{tpu_custom_call.1} parent=1 // loop_footer
      %s22 = sadd.s32 1, %s18
    $region7: #{tpu_custom_call.1} parent=1 // loop_footer_branch
      %17 = sbr.rel target = $region3
    $region8: #{tpu_custom_call.1} parent=1 // loop_exit
      _
    %823 = vsyncpa [#allocation3], 1
    %s824 = scalar_lea.sflag [#allocation3], 1
    %825 = vsyncpa %s824, 1
    %826 = vsyncpa [#allocation6], 1
    %827 = vsyncpa [#allocation4], 1
    %s828 = scalar_lea.sflag [#allocation4], 1
    %829 = vsyncpa %s828, 1

</llo_original>
